<compile_context>
chip_gen: v6e
topology: v6e:2x2x1
jax: 0.10.0
libtpu: 0.0.40
codegen_flags: <defaults>
</compile_context>

<pallas_src>
import functools

import jax
import jax.numpy as jnp
from jax import lax
from jax.experimental import pallas as pl
from jax.experimental.pallas import tpu as pltpu

_LANE = 128
_SUBLANE = 8


def _ipow(x, n):
    """Exact power for small integer exponents via binary exponentiation."""
    if float(n) != int(n):
        return x ** n
    n = int(n)
    if n == 0:
        return jnp.ones_like(x)
    result = None
    base = x
    while n > 0:
        if n & 1:
            result = base if result is None else result * base
        n >>= 1
        if n:
            base = base * base
    return result


def _focal_loss_kernel(p_ref, l_ref, out_ref, *, nc, gamma, beta, hw, tr,
                       need_pad_mask):
    """One (batch, spatial-tile) step.

    p_ref/l_ref: (1, C, TR, 128) blocks of probs / labels (C = nc + 2).
    out_ref:     (1, 8, 128) per-batch accumulator, resident across the
                 spatial grid axis. Rows: 0=pos, 1=neg, 2=crd, 3=npos.
    """
    t = pl.program_id(1)

    @pl.when(t == 0)
    def _():
        out_ref[...] = jnp.zeros_like(out_ref)

    f32 = jnp.float32
    # Channel split fused into the kernel (static slices of the block).
    rc = l_ref[0, 0:nc].astype(f32)         # (NC, TR, 128) real class heatmap
    ryx = l_ref[0, nc:nc + 2].astype(f32)   # (2,  TR, 128) real yx offsets
    pc = p_ref[0, 0:nc].astype(f32)         # (NC, TR, 128) predicted heatmap
    pyx = p_ref[0, nc:nc + 2].astype(f32)   # (2,  TR, 128) predicted offsets

    class_mask = (rc > 0.999).astype(f32)
    object_mask = (jnp.sum(class_mask, axis=0, keepdims=True) > 0).astype(f32)

    one_m_pc = 1.0 - pc
    neg_weights = _ipow(1.0 - rc, beta)
    loss_pos = -jnp.log(pc + 1e-07) * _ipow(one_m_pc, gamma) * class_mask
    loss_neg = (-jnp.log(one_m_pc + 1e-07) * _ipow(pc, gamma)
                * neg_weights * (1.0 - class_mask))

    if need_pad_mask:
        # Only required when gamma == 0 AND the spatial axis is zero-padded
        # (otherwise padded positions contribute exactly 0 to every sum).
        row = lax.broadcasted_iota(jnp.int32, (tr, _LANE), 0)
        lane = lax.broadcasted_iota(jnp.int32, (tr, _LANE), 1)
        pos = (t * tr + row) * _LANE + lane
        valid = (pos < hw).astype(f32)[None]          # (1, TR, 128)
        loss_neg = loss_neg * valid

    # SmoothL1Loss (reduction='none', default beta=1.0)
    diff = pyx - ryx
    adiff = jnp.abs(diff)
    sl1 = jnp.where(adiff < 1.0, 0.5 * diff * diff, adiff - 0.5)
    loss_crd = sl1 * object_mask            # (2, TR, 128) * (1, TR, 128)

    def lane_sum(x):
        # Reduce (K, TR, 128) -> (1, 128): VPU adds across the small leading
        # axis plus one cross-sublane reduce; lanes are reduced later in JAX.
        s2d = jnp.sum(x, axis=0)                     # (TR, 128)
        return jnp.sum(s2d, axis=0, keepdims=True)   # (1, 128)

    out_ref[0, 0:1, :] += lane_sum(loss_pos)
    out_ref[0, 1:2, :] += lane_sum(loss_neg)
    out_ref[0, 2:3, :] += lane_sum(loss_crd)
    out_ref[0, 3:4, :] += lane_sum(class_mask)


@functools.partial(
    jax.jit,
    static_argnames=("nc", "gamma", "beta", "w_pos", "w_neg", "w_crd"))
def _focal_loss_fwd(probs, labels, *, nc, gamma, beta, w_pos, w_neg, w_crd):
    B, C, H, W = probs.shape
    assert labels.shape == probs.shape
    assert C == nc + 2
    HW = H * W

    # Lane-dense layout: rows of 128 lanes, padded to a multiple of 8 rows so
    # tiles use the native (8,128) f32 layout.  Zero padding contributes 0 to
    # every partial sum (class_mask=0, object_mask=0, diff=0, pc**gamma=0 for
    # gamma >= 1; the gamma==0 corner case is masked inside the kernel).
    rows = -(-HW // _LANE)
    rows8 = -(-rows // _SUBLANE) * _SUBLANE
    # ~2 MiB per input block => <= ~8 MiB double-buffered across both inputs
    # (fits the default scoped VMEM on v5e/v6e/v7x); shrink rows for large C.
    target_rows = (2 * 1024 * 1024) // (C * _LANE * 4)
    target_rows = max(_SUBLANE, (target_rows // _SUBLANE) * _SUBLANE)
    if rows8 <= target_rows:
        tr, nt = rows8, 1
    else:
        tr = target_rows
        nt = -(-rows8 // tr)
    rows_pad = tr * nt
    hw_pad = rows_pad * _LANE

    p = probs.reshape(B, C, HW)
    l = labels.reshape(B, C, HW)
    if hw_pad != HW:
        pad = ((0, 0), (0, 0), (0, hw_pad - HW))
        p = jnp.pad(p, pad)
        l = jnp.pad(l, pad)
    p = p.reshape(B, C, rows_pad, _LANE)
    l = l.reshape(B, C, rows_pad, _LANE)

    need_pad_mask = (hw_pad != HW) and not (float(gamma) >= 1.0)
    kernel = functools.partial(
        _focal_loss_kernel, nc=nc, gamma=gamma, beta=beta, hw=HW, tr=tr,
        need_pad_mask=need_pad_mask)

    partial_sums = pl.pallas_call(
        kernel,
        out_shape=jax.ShapeDtypeStruct((B, _SUBLANE, _LANE), jnp.float32),
        grid=(B, nt),
        in_specs=[
            pl.BlockSpec((1, C, tr, _LANE), lambda b, t: (b, 0, t, 0)),
            pl.BlockSpec((1, C, tr, _LANE), lambda b, t: (b, 0, t, 0)),
        ],
        out_specs=pl.BlockSpec((1, _SUBLANE, _LANE), lambda b, t: (b, 0, 0)),
        compiler_params=pltpu.CompilerParams(
            dimension_semantics=("parallel", "arbitrary")),
    )(p, l)

    totals = jnp.sum(partial_sums, axis=(0, 2))     # (8,)
    sum_pos, sum_neg, sum_crd, npos = totals[0], totals[1], totals[2], totals[3]
    nneg = jnp.float32(B * nc * HW) - npos          # true (unpadded) count

    loss_pos = sum_pos / (npos + 1e-08)
    loss_neg = sum_neg / (nneg + 1e-08)
    loss_crd = sum_crd / (npos + 1e-08)
    loss = loss_pos * w_pos + loss_neg * w_neg + loss_crd * w_crd
    return loss, {'pos': loss_pos, 'neg': loss_neg, 'crd': loss_crd}


class FocalLoss:
    """JAX/Pallas port of SPP_head.Focal_Loss (forward only)."""

    def __init__(self, gamma=2, beta=4, num_class=1, loss_weight=None):
        if loss_weight is None:
            loss_weight = {}
        self._num_class = num_class
        self.gamma = gamma
        self.beta = beta
        self._losses = {}
        self._loss = 0
        self._loss_weights = {}
        for key in {'pos', 'neg', 'crd'}:
            self._loss_weights[key] = loss_weight.get(key, 1)

    def __call__(self, probs, labels):
        nc = probs.shape[1] - 2
        loss, losses = _focal_loss_fwd(
            probs, labels,
            nc=nc, gamma=self.gamma, beta=self.beta,
            w_pos=float(self._loss_weights['pos']),
            w_neg=float(self._loss_weights['neg']),
            w_crd=float(self._loss_weights['crd']),
        )
        self._loss = loss
        # TODO(synk): original PyTorch stores .item() floats here; we keep
        # device scalars to avoid a host sync / jit ConcretizationTypeError.
        self._losses = losses
        return self._loss, self._losses


Focal_Loss = FocalLoss  # alias matching the original module name


def _reference(probs, labels, gamma, beta, weights):
    """Pure-JAX reference replicating the PyTorch forward, for verification."""
    real_class, real_yx = labels[:, :-2], labels[:, -2:]
    pred_class, pred_yx = probs[:, :-2], probs[:, -2:]
    class_mask = (real_class > 0.999).astype(jnp.float32)
    object_mask = (jnp.sum(class_mask, axis=1, keepdims=True) > 0).astype(jnp.float32)
    neg_w = (1.0 - real_class) ** beta
    loss_pos = -jnp.log(pred_class + 1e-07) * (1.0 - pred_class) ** gamma * class_mask
    loss_neg = (-jnp.log(1.0 - pred_class + 1e-07) * pred_class ** gamma
                * neg_w * (1.0 - class_mask))
    diff = pred_yx - real_yx
    ad = jnp.abs(diff)
    sl1 = jnp.where(ad < 1.0, 0.5 * diff * diff, ad - 0.5)
    loss_crd = sl1 * object_mask
    npos = class_mask.sum()
    nneg = class_mask.size - npos
    losses = {'pos': loss_pos.sum() / (npos + 1e-08),
              'neg': loss_neg.sum() / (nneg + 1e-08),
              'crd': loss_crd.sum() / (npos + 1e-08)}
    return sum(v * weights[k] for k, v in losses.items())


if __name__ == "__main__":
    key = jax.random.PRNGKey(0)

    def make_inputs(k, B, NC, H, W):
        k1, k2, k3 = jax.random.split(k, 3)
        C = NC + 2
        probs = jax.random.uniform(k1, (B, C, H, W), jnp.float32, 0.01, 0.99)
        u = jax.random.uniform(k2, (B, NC, H, W), jnp.float32)
        real_class = jnp.where(u > 0.9, jnp.float32(1.0), u)  # exact positives
        real_yx = jax.random.uniform(k3, (B, 2, H, W), jnp.float32, -2.0, 2.0)
        labels = jnp.concatenate([real_class, real_yx], axis=1)
        return probs, labels

    k_a, k_b = jax.random.split(key)

    # Case 1: default num_class=1 (C=3), lane-aligned spatial size.
    probs, labels = make_inputs(k_a, B=2, NC=1, H=16, W=16)
    mod = FocalLoss(gamma=2, beta=4, num_class=1)
    loss, losses = mod(probs, labels)
    loss = jax.block_until_ready(loss)
    ref = jax.block_until_ready(
        _reference(probs, labels, mod.gamma, mod.beta, mod._loss_weights))
    assert jnp.allclose(loss, ref, rtol=5e-4, atol=1e-5), (float(loss), float(ref))

    # Case 2: num_class=2 (C=4), ragged spatial size -> exercises the
    # zero-padding path and non-default loss weights.
    probs2, labels2 = make_inputs(k_b, B=2, NC=2, H=15, W=17)
    mod2 = FocalLoss(gamma=2, beta=4, num_class=2,
                     loss_weight={'pos': 2.0, 'crd': 0.5})
    loss2, _ = mod2(probs2, labels2)
    loss2 = jax.block_until_ready(loss2)
    ref2 = jax.block_until_ready(
        _reference(probs2, labels2, mod2.gamma, mod2.beta, mod2._loss_weights))
    assert jnp.allclose(loss2, ref2, rtol=5e-4, atol=1e-5), (float(loss2), float(ref2))

    print("KERNEL_OK")
</pallas_src>

<mosaic_0001>
module attributes {stable_mosaic.version = 11 : i64} {
  func.func @_focal_loss_kernel(%arg0: i32, %arg1: i32, %arg2: memref<1x3x8x128xf32, #tpu.memory_space<vmem>>, %arg3: memref<1x3x8x128xf32, #tpu.memory_space<vmem>>, %arg4: memref<1x8x128xf32, #tpu.memory_space<vmem>>) attributes {dimension_semantics = [#tpu.dimension_semantics<parallel>, #tpu.dimension_semantics<arbitrary>], iteration_bounds = array<i64: 2, 1>, scalar_prefetch = 0 : i64, scratch_operands = 0 : i64, tpu.core_type = #tpu.core_type<tc>, window_params = [{transform_indices = @transform_0, window_bounds = array<i64: 1, 3, 8, 128>}, {transform_indices = @transform_1, window_bounds = array<i64: 1, 3, 8, 128>}, {transform_indices = @transform_2, window_bounds = array<i64: 1, 8, 128>}]} {
    %c0_i32 = arith.constant 0 : i32
    %0 = arith.cmpi eq, %arg1, %c0_i32 : i32
    %1 = arith.extui %0 : i1 to i32
    %c0_i32_0 = arith.constant 0 : i32
    %2 = arith.cmpi ne, %1, %c0_i32_0 : i32
    scf.if %2 {
      %cst_57 = arith.constant 0.000000e+00 : f32
      %94 = vector.broadcast %cst_57 : f32 to vector<1x8x128xf32>
      %c0_58 = arith.constant 0 : index
      %c0_59 = arith.constant 0 : index
      %c0_60 = arith.constant 0 : index
      %95 = vector.load %arg4[%c0_58, %c0_59, %c0_60] : memref<1x8x128xf32, #tpu.memory_space<vmem>>, vector<1x8x128xf32>
      tpu.vector_store %arg4[%c0_58, %c0_59, %c0_60], %94 {strides = array<i32>} : memref<1x8x128xf32, #tpu.memory_space<vmem>>, vector<1x8x128xf32>,
    } else {
    }
    %c0 = arith.constant 0 : index
    %c0_1 = arith.constant 0 : index
    %c0_2 = arith.constant 0 : index
    %c0_3 = arith.constant 0 : index
    %3 = vector.load %arg3[%c0, %c0_1, %c0_2, %c0_3] : memref<1x3x8x128xf32, #tpu.memory_space<vmem>>, vector<1x1x8x128xf32>
    %4 = vector.shape_cast %3 : vector<1x1x8x128xf32> to vector<1x8x128xf32>
    %c0_4 = arith.constant 0 : index
    %c1 = arith.constant 1 : index
    %c0_5 = arith.constant 0 : index
    %c0_6 = arith.constant 0 : index
    %5 = vector.load %arg3[%c0_4, %c1, %c0_5, %c0_6] : memref<1x3x8x128xf32, #tpu.memory_space<vmem>>, vector<1x2x8x128xf32>
    %6 = vector.shape_cast %5 : vector<1x2x8x128xf32> to vector<2x8x128xf32>
    %c0_7 = arith.constant 0 : index
    %c0_8 = arith.constant 0 : index
    %c0_9 = arith.constant 0 : index
    %c0_10 = arith.constant 0 : index
    %7 = vector.load %arg2[%c0_7, %c0_8, %c0_9, %c0_10] : memref<1x3x8x128xf32, #tpu.memory_space<vmem>>, vector<1x1x8x128xf32>
    %8 = vector.shape_cast %7 : vector<1x1x8x128xf32> to vector<1x8x128xf32>
    %c0_11 = arith.constant 0 : index
    %c1_12 = arith.constant 1 : index
    %c0_13 = arith.constant 0 : index
    %c0_14 = arith.constant 0 : index
    %9 = vector.load %arg2[%c0_11, %c1_12, %c0_13, %c0_14] : memref<1x3x8x128xf32, #tpu.memory_space<vmem>>, vector<1x2x8x128xf32>
    %10 = vector.shape_cast %9 : vector<1x2x8x128xf32> to vector<2x8x128xf32>
    %cst = arith.constant 9.990000e-01 : f32
    %11 = vector.broadcast %cst : f32 to vector<1x8x128xf32>
    %12 = arith.cmpf ogt, %4, %11 : vector<1x8x128xf32>
    %13 = arith.extui %12 : vector<1x8x128xi1> to vector<1x8x128xi32>
    %14 = arith.sitofp %13 : vector<1x8x128xi32> to vector<1x8x128xf32>
    %cst_15 = arith.constant dense<0.000000e+00> : vector<8x128xf32>
    %15 = vector.multi_reduction <add>, %14, %cst_15 [0] : vector<1x8x128xf32> to vector<8x128xf32>
    %16 = vector.shape_cast %15 : vector<8x128xf32> to vector<1x8x128xf32>
    %cst_16 = arith.constant 0.000000e+00 : f32
    %17 = vector.broadcast %cst_16 : f32 to vector<1x8x128xf32>
    %18 = arith.cmpf ogt, %16, %17 : vector<1x8x128xf32>
    %19 = arith.extui %18 : vector<1x8x128xi1> to vector<1x8x128xi32>
    %20 = arith.sitofp %19 : vector<1x8x128xi32> to vector<1x8x128xf32>
    %cst_17 = arith.constant 1.000000e+00 : f32
    %21 = vector.broadcast %cst_17 : f32 to vector<1x8x128xf32>
    %22 = arith.subf %21, %8 : vector<1x8x128xf32>
    %cst_18 = arith.constant 1.000000e+00 : f32
    %23 = vector.broadcast %cst_18 : f32 to vector<1x8x128xf32>
    %24 = arith.subf %23, %4 : vector<1x8x128xf32>
    %25 = arith.mulf %24, %24 : vector<1x8x128xf32>
    %26 = arith.mulf %25, %25 : vector<1x8x128xf32>
    %cst_19 = arith.constant 1.000000e-07 : f32
    %27 = vector.broadcast %cst_19 : f32 to vector<1x8x128xf32>
    %28 = arith.addf %8, %27 : vector<1x8x128xf32>
    %29 = math.log %28 : vector<1x8x128xf32>
    %cst_20 = arith.constant 0.000000e+00 : f32
    %30 = vector.broadcast %cst_20 : f32 to vector<1x8x128xf32>
    %31 = arith.subf %30, %29 : vector<1x8x128xf32>
    %32 = arith.mulf %22, %22 : vector<1x8x128xf32>
    %33 = arith.mulf %31, %32 : vector<1x8x128xf32>
    %34 = arith.mulf %33, %14 : vector<1x8x128xf32>
    %cst_21 = arith.constant 1.000000e-07 : f32
    %35 = vector.broadcast %cst_21 : f32 to vector<1x8x128xf32>
    %36 = arith.addf %22, %35 : vector<1x8x128xf32>
    %37 = math.log %36 : vector<1x8x128xf32>
    %cst_22 = arith.constant 0.000000e+00 : f32
    %38 = vector.broadcast %cst_22 : f32 to vector<1x8x128xf32>
    %39 = arith.subf %38, %37 : vector<1x8x128xf32>
    %40 = arith.mulf %8, %8 : vector<1x8x128xf32>
    %41 = arith.mulf %39, %40 : vector<1x8x128xf32>
    %42 = arith.mulf %41, %26 : vector<1x8x128xf32>
    %cst_23 = arith.constant 1.000000e+00 : f32
    %43 = vector.broadcast %cst_23 : f32 to vector<1x8x128xf32>
    %44 = arith.subf %43, %14 : vector<1x8x128xf32>
    %45 = arith.mulf %42, %44 : vector<1x8x128xf32>
    %46 = arith.subf %10, %6 : vector<2x8x128xf32>
    %47 = math.absf %46 : vector<2x8x128xf32>
    %cst_24 = arith.constant 1.000000e+00 : f32
    %48 = vector.broadcast %cst_24 : f32 to vector<2x8x128xf32>
    %49 = arith.cmpf olt, %47, %48 : vector<2x8x128xf32>
    %cst_25 = arith.constant 5.000000e-01 : f32
    %50 = vector.broadcast %cst_25 : f32 to vector<2x8x128xf32>
    %51 = arith.mulf %50, %46 : vector<2x8x128xf32>
    %52 = arith.mulf %51, %46 : vector<2x8x128xf32>
    %cst_26 = arith.constant 5.000000e-01 : f32
    %53 = vector.broadcast %cst_26 : f32 to vector<2x8x128xf32>
    %54 = arith.subf %47, %53 : vector<2x8x128xf32>
    %55 = arith.select %49, %52, %54 : vector<2x8x128xi1>, vector<2x8x128xf32>
    %56 = vector.broadcast %20 : vector<1x8x128xf32> to vector<2x8x128xf32>
    %57 = arith.mulf %55, %56 : vector<2x8x128xf32>
    %c0_27 = arith.constant 0 : index
    %c0_28 = arith.constant 0 : index
    %c0_29 = arith.constant 0 : index
    %58 = vector.load %arg4[%c0_27, %c0_28, %c0_29] : memref<1x8x128xf32, #tpu.memory_space<vmem>>, vector<1x1x128xf32>
    %59 = vector.shape_cast %58 : vector<1x1x128xf32> to vector<1x128xf32>
    %cst_30 = arith.constant dense<0.000000e+00> : vector<8x128xf32>
    %60 = vector.multi_reduction <add>, %34, %cst_30 [0] : vector<1x8x128xf32> to vector<8x128xf32>
    %cst_31 = arith.constant dense<0.000000e+00> : vector<128xf32>
    %61 = vector.multi_reduction <add>, %60, %cst_31 [0] : vector<8x128xf32> to vector<128xf32>
    %62 = vector.shape_cast %61 : vector<128xf32> to vector<1x128xf32>
    %63 = arith.addf %59, %62 : vector<1x128xf32>
    %c0_32 = arith.constant 0 : index
    %c0_33 = arith.constant 0 : index
    %c0_34 = arith.constant 0 : index
    %64 = vector.load %arg4[%c0_32, %c0_33, %c0_34] : memref<1x8x128xf32, #tpu.memory_space<vmem>>, vector<1x1x128xf32>
    %65 = vector.shape_cast %64 : vector<1x1x128xf32> to vector<1x128xf32>
    %66 = vector.shape_cast %63 : vector<1x128xf32> to vector<1x1x128xf32>
    tpu.vector_store %arg4[%c0_32, %c0_33, %c0_34], %66 {strides = array<i32>} : memref<1x8x128xf32, #tpu.memory_space<vmem>>, vector<1x1x128xf32>,
    %c0_35 = arith.constant 0 : index
    %c1_36 = arith.constant 1 : index
    %c0_37 = arith.constant 0 : index
    %67 = vector.load %arg4[%c0_35, %c1_36, %c0_37] : memref<1x8x128xf32, #tpu.memory_space<vmem>>, vector<1x1x128xf32>
    %68 = vector.shape_cast %67 : vector<1x1x128xf32> to vector<1x128xf32>
    %cst_38 = arith.constant dense<0.000000e+00> : vector<8x128xf32>
    %69 = vector.multi_reduction <add>, %45, %cst_38 [0] : vector<1x8x128xf32> to vector<8x128xf32>
    %cst_39 = arith.constant dense<0.000000e+00> : vector<128xf32>
    %70 = vector.multi_reduction <add>, %69, %cst_39 [0] : vector<8x128xf32> to vector<128xf32>
    %71 = vector.shape_cast %70 : vector<128xf32> to vector<1x128xf32>
    %72 = arith.addf %68, %71 : vector<1x128xf32>
    %c0_40 = arith.constant 0 : index
    %c1_41 = arith.constant 1 : index
    %c0_42 = arith.constant 0 : index
    %73 = vector.load %arg4[%c0_40, %c1_41, %c0_42] : memref<1x8x128xf32, #tpu.memory_space<vmem>>, vector<1x1x128xf32>
    %74 = vector.shape_cast %73 : vector<1x1x128xf32> to vector<1x128xf32>
    %75 = vector.shape_cast %72 : vector<1x128xf32> to vector<1x1x128xf32>
    tpu.vector_store %arg4[%c0_40, %c1_41, %c0_42], %75 {strides = array<i32>} : memref<1x8x128xf32, #tpu.memory_space<vmem>>, vector<1x1x128xf32>,
    %c0_43 = arith.constant 0 : index
    %c2 = arith.constant 2 : index
    %c0_44 = arith.constant 0 : index
    %76 = vector.load %arg4[%c0_43, %c2, %c0_44] : memref<1x8x128xf32, #tpu.memory_space<vmem>>, vector<1x1x128xf32>
    %77 = vector.shape_cast %76 : vector<1x1x128xf32> to vector<1x128xf32>
    %cst_45 = arith.constant dense<0.000000e+00> : vector<8x128xf32>
    %78 = vector.multi_reduction <add>, %57, %cst_45 [0] : vector<2x8x128xf32> to vector<8x128xf32>
    %cst_46 = arith.constant dense<0.000000e+00> : vector<128xf32>
    %79 = vector.multi_reduction <add>, %78, %cst_46 [0] : vector<8x128xf32> to vector<128xf32>
    %80 = vector.shape_cast %79 : vector<128xf32> to vector<1x128xf32>
    %81 = arith.addf %77, %80 : vector<1x128xf32>
    %c0_47 = arith.constant 0 : index
    %c2_48 = arith.constant 2 : index
    %c0_49 = arith.constant 0 : index
    %82 = vector.load %arg4[%c0_47, %c2_48, %c0_49] : memref<1x8x128xf32, #tpu.memory_space<vmem>>, vector<1x1x128xf32>
    %83 = vector.shape_cast %82 : vector<1x1x128xf32> to vector<1x128xf32>
    %84 = vector.shape_cast %81 : vector<1x128xf32> to vector<1x1x128xf32>
    tpu.vector_store %arg4[%c0_47, %c2_48, %c0_49], %84 {strides = array<i32>} : memref<1x8x128xf32, #tpu.memory_space<vmem>>, vector<1x1x128xf32>,
    %c0_50 = arith.constant 0 : index
    %c3 = arith.constant 3 : index
    %c0_51 = arith.constant 0 : index
    %85 = vector.load %arg4[%c0_50, %c3, %c0_51] : memref<1x8x128xf32, #tpu.memory_space<vmem>>, vector<1x1x128xf32>
    %86 = vector.shape_cast %85 : vector<1x1x128xf32> to vector<1x128xf32>
    %cst_52 = arith.constant dense<0.000000e+00> : vector<8x128xf32>
    %87 = vector.multi_reduction <add>, %14, %cst_52 [0] : vector<1x8x128xf32> to vector<8x128xf32>
    %cst_53 = arith.constant dense<0.000000e+00> : vector<128xf32>
    %88 = vector.multi_reduction <add>, %87, %cst_53 [0] : vector<8x128xf32> to vector<128xf32>
    %89 = vector.shape_cast %88 : vector<128xf32> to vector<1x128xf32>
    %90 = arith.addf %86, %89 : vector<1x128xf32>
    %c0_54 = arith.constant 0 : index
    %c3_55 = arith.constant 3 : index
    %c0_56 = arith.constant 0 : index
    %91 = vector.load %arg4[%c0_54, %c3_55, %c0_56] : memref<1x8x128xf32, #tpu.memory_space<vmem>>, vector<1x1x128xf32>
    %92 = vector.shape_cast %91 : vector<1x1x128xf32> to vector<1x128xf32>
    %93 = vector.shape_cast %90 : vector<1x128xf32> to vector<1x1x128xf32>
    tpu.vector_store %arg4[%c0_54, %c3_55, %c0_56], %93 {strides = array<i32>} : memref<1x8x128xf32, #tpu.memory_space<vmem>>, vector<1x1x128xf32>,
    return
  }
  func.func @transform_0(%arg0: i32, %arg1: i32) -> (i32, i32, i32, i32) {
    %c0_i32 = arith.constant 0 : i32
    %c0_i32_0 = arith.constant 0 : i32
    %c0_i32_1 = arith.constant 0 : i32
    return %arg0, %c0_i32, %arg1, %c0_i32_0 : i32, i32, i32, i32
  }
  func.func @transform_1(%arg0: i32, %arg1: i32) -> (i32, i32, i32, i32) {
    %c0_i32 = arith.constant 0 : i32
    %c0_i32_0 = arith.constant 0 : i32
    %c0_i32_1 = arith.constant 0 : i32
    return %arg0, %c0_i32, %arg1, %c0_i32_0 : i32, i32, i32, i32
  }
  func.func @transform_2(%arg0: i32, %arg1: i32) -> (i32, i32, i32) {
    %c0_i32 = arith.constant 0 : i32
    %c0_i32_0 = arith.constant 0 : i32
    %c0_i32_1 = arith.constant 0 : i32
    return %arg0, %c0_i32, %c0_i32_0 : i32, i32, i32
  }
}

</mosaic_0001>

<llo_original>
// kernel: _focal_loss_fwd.1
$region0: #{_focal_loss_fwd.1}
  #allocation0 [shape = 'u32[]', space=smem, size = 0x4, offset = 0x4, fixed_abs, tag = 'smem constant byte address 0x4 - core index']
  #allocation1 [shape = 'u32[144,128]{1,0:T(1,128)}', space=vmem, size = 0x12000, scoped, tag = 'internal scratch']
  %s0 = inlined_call_operand.vmem [shape: f32[2,3,8,128], index: 0, kind: input, shape index: {}]
  %s1 = inlined_call_operand.vmem [shape: f32[2,3,8,128], index: 1, kind: input, shape index: {}]
  %s2 = inlined_call_operand.vmem [shape: f32[2,8,128], index: 2, kind: output, shape index: {}]
  %s3 = sld [smem:[#allocation0]]
  $region45: #{_focal_loss_fwd.1} parent=0
    _
  %s5 = ssub.s32 1, %s3
  %s6 = scalar_select 0, %s5, %s3
  loop: start=0, step=1, limit=4
  $region2: #{_focal_loss_fwd.1} parent=0 // loop_pre_header
    _
  $region3: #{_focal_loss_fwd.1} parent=0 // loop_header
    %s8 = sphi 0, %s12
    %p9 = scmp.ge.s32.totalorder %s8, 4
    %s15 = sphi 0, %s27
    %s16 = sphi 0, %s23
    %s17 = sphi 0, %s15
    %s18 = sphi 0, %s16
    %s19 = sphi 0, %s17
    %s20 = sphi 0, %s18
    %s32 = sphi 0, %s34
    %s35 = sphi 0, %s32
    %s36 = sphi 0, %s35
    %s52 = sphi 0, %s36
    %s60 = sphi 0, %s62
    %s63 = sphi 0, %s60
    %s64 = sphi 0, %s63
    %s80 = sphi 0, %s64
    %s86 = sphi 0, %s88
    %s89 = sphi 0, %s86
    %s90 = sphi 0, %s89
    %s106 = sphi 0, %s90
  $region4: #{_focal_loss_fwd.1} parent=0 // loop_header_branch
    %11 = sbr.rel (%p9) target = $region8
  $region5: #{_focal_loss_fwd.1} parent=0 // loop_body
    %s13 = ssub.s32 %s8, 1
    %s14 = ssub.s32 %s8, 2
    %s21 = sadd.s32 1, %s16
    %p22 = scmp.ge.s32.totalorder %s21, 1
    %s23 = scalar_select %p22, 0, %s21
    %s24 = sadd.s32 1, %s15
    %s25 = scalar_select %p22, %s24, %s15
    %p26 = scmp.ge.s32.totalorder %s25, 2
    %s27 = scalar_select %p26, 0, %s25
    %s28 = ssub.s32 %s15, %s27
    %s29 = ssub.s32 %s16, %s23
    %s30 = sor.u32 %s28, %s29
    %p31 = scmp.eq.s32.totalorder %s30, 0
    %s33 = sadd.s32 %s32, 1
    %s34 = scalar_select %p31, %s32, %s33
    %p37 = pneg %p31
    %p38 = scmp.eq.s32.totalorder %s8, 1
    %p39 = por %p37, %p38
    %p40 = scmp.ne.s32.totalorder %s32, %s35
    %p41 = scmp.eq.s32.totalorder %s8, 0
    %p42 = por %p40, %p41
    %p43 = scmp.ne.s32.totalorder %s32, %s35
    %p44 = scmp.eq.s32.totalorder %s13, 1
    %p45 = por %p43, %p44
    %p46 = scmp.ne.s32.totalorder %s35, %s36
    %p47 = scmp.eq.s32.totalorder %s13, 0
    %p48 = por %p46, %p47
    %p49 = scmp.ne.s32.totalorder %s35, %s36
    %p50 = scmp.eq.s32.totalorder %s14, 1
    %p51 = por %p49, %p50
    %p53 = scmp.ne.s32.totalorder %s36, %s52
    %p54 = scmp.eq.s32.totalorder %s14, 0
    %p55 = por %p53, %p54
    %s56 = ssub.s32 %s15, %s27
    %s57 = ssub.s32 %s16, %s23
    %s58 = sor.u32 %s56, %s57
    %p59 = scmp.eq.s32.totalorder %s58, 0
    %s61 = sadd.s32 %s60, 1
    %s62 = scalar_select %p59, %s60, %s61
    %p65 = pneg %p59
    %p66 = scmp.eq.s32.totalorder %s8, 1
    %p67 = por %p65, %p66
    %p68 = scmp.ne.s32.totalorder %s60, %s63
    %p69 = scmp.eq.s32.totalorder %s8, 0
    %p70 = por %p68, %p69
    %p71 = scmp.ne.s32.totalorder %s60, %s63
    %p72 = scmp.eq.s32.totalorder %s13, 1
    %p73 = por %p71, %p72
    %p74 = scmp.ne.s32.totalorder %s63, %s64
    %p75 = scmp.eq.s32.totalorder %s13, 0
    %p76 = por %p74, %p75
    %p77 = scmp.ne.s32.totalorder %s63, %s64
    %p78 = scmp.eq.s32.totalorder %s14, 1
    %p79 = por %p77, %p78
    %p81 = scmp.ne.s32.totalorder %s64, %s80
    %p82 = scmp.eq.s32.totalorder %s14, 0
    %p83 = por %p81, %p82
    %s84 = ssub.s32 %s15, %s27
    %p85 = scmp.eq.s32.totalorder %s84, 0
    %s87 = sadd.s32 %s86, 1
    %s88 = scalar_select %p85, %s86, %s87
    %p91 = pneg %p85
    %p92 = scmp.eq.s32.totalorder %s8, 1
    %p93 = por %p91, %p92
    %p94 = scmp.ne.s32.totalorder %s86, %s89
    %p95 = scmp.eq.s32.totalorder %s8, 0
    %p96 = por %p94, %p95
    %p97 = scmp.ne.s32.totalorder %s86, %s89
    %p98 = scmp.eq.s32.totalorder %s13, 1
    %p99 = por %p97, %p98
    %p100 = scmp.ne.s32.totalorder %s89, %s90
    %p101 = scmp.eq.s32.totalorder %s13, 0
    %p102 = por %p100, %p101
    %p103 = scmp.ne.s32.totalorder %s89, %s90
    %p104 = scmp.eq.s32.totalorder %s14, 1
    %p105 = por %p103, %p104
    %p107 = scmp.ne.s32.totalorder %s90, %s106
    %p108 = scmp.eq.s32.totalorder %s14, 0
    %p109 = por %p107, %p108
    %p110 = scmp.le.s32.totalorder 1, %s8
    %p111 = scmp.lt.s32.totalorder %s8, 3
    %p112 = pnand %p110, %p111
    %p113 = pneg %p112
    // Predicated region
    $region9: #{_focal_loss_fwd.1} parent=5 // pred_check
      _
    $region10: #{_focal_loss_fwd.1} parent=5 // pred_check_branch
      %115 = sbr.rel (%p112) target = $region12
    $region11: #{_focal_loss_fwd.1} parent=5 // pred_region
      %s116 = ssub.s32 %s8, 1
    $region12: #{_focal_loss_fwd.1} parent=5 // pred_fallthru
      _
    %p117 = scmp.lt.s32.totalorder %s8, 2
    // Predicated region
    $region13: #{_focal_loss_fwd.1} parent=5 // pred_check
      %p118 = pneg %p117
    $region14: #{_focal_loss_fwd.1} parent=5 // pred_check_branch
      %120 = sbr.rel (%p118) target = $region16
    $region15: #{_focal_loss_fwd.1} parent=5 // pred_region
      // Predicated region
      $region17: #{_focal_loss_fwd.1} parent=15 // pred_check
        %p121 = pneg %p42
      $region18: #{_focal_loss_fwd.1} parent=15 // pred_check_branch
        %123 = sbr.rel (%p121) target = $region20
      $region19: #{_focal_loss_fwd.1} parent=15 // pred_region
        %p124 = scmp.lt.s32.totalorder %s15, 1
        %s125 = scalar_select %p124, %s15, 1
        %p126 = scmp.lt.s32.totalorder %s16, 0
        %s127 = scalar_select %p126, %s16, 0
        %s128 = smul.addr %s125, 3
        %s129 = sadd.s32 %s127, %s128
        %s130 = smul.addr %s129, 8
        %s131 = scalar_lea.vmem %s0, %s130
      $region20: #{_focal_loss_fwd.1} parent=15 // pred_fallthru
        _
      // Predicated region
      $region21: #{_focal_loss_fwd.1} parent=15 // pred_check
        %p132 = pneg %p70
      $region22: #{_focal_loss_fwd.1} parent=15 // pred_check_branch
        %134 = sbr.rel (%p132) target = $region24
      $region23: #{_focal_loss_fwd.1} parent=15 // pred_region
        %p135 = scmp.lt.s32.totalorder %s15, 1
        %s136 = scalar_select %p135, %s15, 1
        %p137 = scmp.lt.s32.totalorder %s16, 0
        %s138 = scalar_select %p137, %s16, 0
        %s139 = smul.addr %s136, 3
        %s140 = sadd.s32 %s138, %s139
        %s141 = smul.addr %s140, 8
        %s142 = scalar_lea.vmem %s1, %s141
      $region24: #{_focal_loss_fwd.1} parent=15 // pred_fallthru
        _
    $region16: #{_focal_loss_fwd.1} parent=5 // pred_fallthru
      _
    %p143 = scmp.le.s32.totalorder 1, %s8
    %p144 = scmp.lt.s32.totalorder %s8, 3
    %p145 = pnand %p143, %p144
    %p146 = pneg %p145
    // Predicated region
    $region25: #{_focal_loss_fwd.1} parent=5 // pred_check
      _
    $region26: #{_focal_loss_fwd.1} parent=5 // pred_check_branch
      %148 = sbr.rel (%p145) target = $region28
    $region27: #{_focal_loss_fwd.1} parent=5 // pred_region
      %s149 = ssub.s32 %s8, 1
      %p150 = scmp.lt.s32.totalorder %s17, 1
      %s151 = scalar_select %p150, %s17, 1
      %p152 = scmp.lt.s32.totalorder %s18, 0
      %s153 = scalar_select %p152, %s18, 0
      %s154 = smul.addr %s151, 3
      %s155 = sadd.s32 %s153, %s154
      %s156 = smul.addr %s155, 8
      %s157 = scalar_lea.vmem %s0, %s156
      %p158 = pneg %p48
      %p159 = pneg %p45
      %p160 = scmp.lt.s32.totalorder %s17, 1
      %s161 = scalar_select %p160, %s17, 1
      %p162 = scmp.lt.s32.totalorder %s18, 0
      %s163 = scalar_select %p162, %s18, 0
      %s164 = smul.addr %s161, 3
      %s165 = sadd.s32 %s163, %s164
      %s166 = smul.addr %s165, 8
      %s167 = scalar_lea.vmem %s1, %s166
      %p168 = pneg %p76
      %p169 = pneg %p73
      %p170 = pneg %p102
      %p171 = pneg %p99
      %p172 = scmp.lt.s32.totalorder %s17, 1
      %s173 = scalar_select %p172, %s17, 1
      %s174 = smul.addr %s173, 8
      %s175 = scalar_lea.vmem %s2, %s174
      %p176 = scmp.lt.s32.totalorder %s17, 1
      %s177 = scalar_select %p176, %s17, 1
      %p178 = scmp.lt.s32.totalorder %s18, 0
      %s179 = scalar_select %p178, %s18, 0
      %s180 = smul.addr %s177, 3
      %s181 = sadd.s32 %s179, %s180
      %s182 = smul.addr %s181, 8
      %s183 = scalar_lea.vmem %s0, %s182
      %p184 = scmp.lt.s32.totalorder %s17, 1
      %s185 = scalar_select %p184, %s17, 1
      %p186 = scmp.lt.s32.totalorder %s18, 0
      %s187 = scalar_select %p186, %s18, 0
      %s188 = smul.addr %s185, 3
      %s189 = sadd.s32 %s187, %s188
      %s190 = smul.addr %s189, 8
      %s191 = scalar_lea.vmem %s1, %s190
      %p192 = scmp.lt.s32.totalorder %s17, 1
      %s193 = scalar_select %p192, %s17, 1
      %s194 = smul.addr %s193, 8
      %s195 = scalar_lea.vmem %s2, %s194
      %p196 = scmp.eq.s32.totalorder %s18, 0
      // Predicated region
      $region29: #{_focal_loss_fwd.1} parent=27 // pred_check
        %p197 = pneg %p196
      $region30: #{_focal_loss_fwd.1} parent=27 // pred_check_branch
        %199 = sbr.rel (%p197) target = $region32
      $region31: #{_focal_loss_fwd.1} parent=27 // pred_region
        %200 = vst [vmem:[%s195] sm:$0xff] 0.0
      $region32: #{_focal_loss_fwd.1} parent=27 // pred_fallthru
        _
      %v201 = vld [vmem:[%s191] sm:$0xff]
      %s202 = scalar_lea.vmem %s191, 8
      %v203 = vld [vmem:[%s202] sm:$0xff]
      %v204 = vld [vmem:[%s202 + $0x8] sm:$0xff]
      %v205 = vld [vmem:[%s183] sm:$0xff]
      %s206 = scalar_lea.vmem %s183, 8
      %v207 = vld [vmem:[%s206] sm:$0xff]
      %v208 = vld [vmem:[%s206 + $0x8] sm:$0xff]
      %vm209 = vcmp.gt.f32.partialorder %v201, 0.999
      %v210 = vsel %vm209, 1, 0
      %v211 = vcvt.s32.f32 %v210
      %v212 = vadd.f32 %v211, 0.0
      %vm213 = vcmp.gt.f32.partialorder %v212, 0.0
      %v214 = vsel %vm213, 1, 0
      %v215 = vcvt.s32.f32 %v214
      %v216 = vsub.f32 1.0, %v205
      %v217 = vsub.f32 1.0, %v201
      %v218 = vmul.f32 %v217, %v217
      %v219 = vmul.f32 %v218, %v218
      %v220 = vadd.f32 %v205, 1e-07
      %v221 = vlog2.pop %v220
      %v222 = vmul.f32 %v221, 0.6931472
      %v223 = vsub.f32 0.0, %v222
      %v224 = vmul.f32 %v216, %v216
      %v225 = vmul.f32 %v223, %v224
      %v226 = vmul.f32 %v225, %v211
      %v227 = vadd.f32 %v216, 1e-07
      %v228 = vlog2.pop %v227
      %v229 = vmul.f32 %v228, 0.6931472
      %v230 = vsub.f32 0.0, %v229
      %v231 = vmul.f32 %v205, %v205
      %v232 = vmul.f32 %v230, %v231
      %v233 = vmul.f32 %v232, %v219
      %v234 = vsub.f32 1.0, %v211
      %v235 = vmul.f32 %v233, %v234
      %v236 = vsub.f32 %v207, %v203
      %v237 = vsub.f32 %v208, %v204
      %v238 = vand.u32 2147483647, %v236
      %v239 = vand.u32 2147483647, %v237
      %vm240 = vcmp.lt.f32.partialorder %v238, 1.0
      %vm241 = vcmp.lt.f32.partialorder %v239, 1.0
      %v242 = vmul.f32 %v236, 0.5
      %v243 = vmul.f32 %v237, 0.5
      %v244 = vmul.f32 %v242, %v236
      %v245 = vmul.f32 %v243, %v237
      %v246 = vsub.f32 %v238, 0.5
      %v247 = vsub.f32 %v239, 0.5
      %v248 = vsel %vm240, %v244, %v246
      %v249 = vsel %vm241, %v245, %v247
      %v250 = vmul.f32 %v248, %v215
      %v251 = vmul.f32 %v249, %v215
      %v252 = vld [vmem:[%s195] sm:$0x1]
      %v253 = vadd.f32 %v226, 0.0
      %v254 = vrot.slane %v253, 4
      %v255 = vadd.f32 %v253, %v254
      %v256 = vrot.slane %v255, 2
      %v257 = vadd.f32 %v255, %v256
      %v258 = vrot.slane %v257, 1
      %v259 = vadd.f32 %v257, %v258
      %v260 = vadd.f32 %v252, %v259
      %261 = vst [vmem:[%s195] sm:$0x1] %v260
      %v262 = vld [vmem:[%s195 + $0x1] sm:$0x1]
      %v263 = vadd.f32 %v235, 0.0
      %v264 = vrot.slane %v263, 4
      %v265 = vadd.f32 %v263, %v264
      %v266 = vrot.slane %v265, 2
      %v267 = vadd.f32 %v265, %v266
      %v268 = vrot.slane %v267, 1
      %v269 = vadd.f32 %v267, %v268
      %v270 = vadd.f32 %v262, %v269
      %271 = vst [vmem:[%s195 + $0x1] sm:$0x1] %v270
      %v272 = vld [vmem:[%s195 + $0x2] sm:$0x1]
      %v273 = vadd.f32 %v250, %v251
      %v274 = vrot.slane %v273, 4
      %v275 = vadd.f32 %v273, %v274
      %v276 = vrot.slane %v275, 2
      %v277 = vadd.f32 %v275, %v276
      %v278 = vrot.slane %v277, 1
      %v279 = vadd.f32 %v277, %v278
      %v280 = vadd.f32 %v272, %v279
      %281 = vst [vmem:[%s195 + $0x2] sm:$0x1] %v280
      %v282 = vld [vmem:[%s195 + $0x3] sm:$0x1]
      %v283 = vrot.slane %v212, 4
      %v284 = vadd.f32 %v212, %v283
      %v285 = vrot.slane %v284, 2
      %v286 = vadd.f32 %v284, %v285
      %v287 = vrot.slane %v286, 1
      %v288 = vadd.f32 %v286, %v287
      %v289 = vadd.f32 %v282, %v288
      %290 = vst [vmem:[%s195 + $0x3] sm:$0x1] %v289
      %p291 = scmp.lt.s32.totalorder %s17, 1
      %s292 = scalar_select %p291, %s17, 1
      %s293 = smul.addr %s292, 8
      %s294 = scalar_lea.vmem %s2, %s293
      // Predicated region
      $region33: #{_focal_loss_fwd.1} parent=27 // pred_check
        %p295 = pneg %p99
      $region34: #{_focal_loss_fwd.1} parent=27 // pred_check_branch
        %297 = sbr.rel (%p295) target = $region36
      $region35: #{_focal_loss_fwd.1} parent=27 // pred_region
        _
      $region36: #{_focal_loss_fwd.1} parent=27 // pred_fallthru
        _
    $region28: #{_focal_loss_fwd.1} parent=5 // pred_fallthru
      _
    %p298 = scmp.le.s32.totalorder 2, %s8
    // Predicated region
    $region37: #{_focal_loss_fwd.1} parent=5 // pred_check
      %p299 = pneg %p298
    $region38: #{_focal_loss_fwd.1} parent=5 // pred_check_branch
      %301 = sbr.rel (%p299) target = $region40
    $region39: #{_focal_loss_fwd.1} parent=5 // pred_region
      %s302 = ssub.s32 %s8, 2
      // Predicated region
      $region41: #{_focal_loss_fwd.1} parent=39 // pred_check
        %p303 = pneg %p105
      $region42: #{_focal_loss_fwd.1} parent=39 // pred_check_branch
        %305 = sbr.rel (%p303) target = $region44
      $region43: #{_focal_loss_fwd.1} parent=39 // pred_region
        %p306 = scmp.lt.s32.totalorder %s19, 1
        %s307 = scalar_select %p306, %s19, 1
        %s308 = smul.addr %s307, 8
        %s309 = scalar_lea.vmem %s2, %s308
      $region44: #{_focal_loss_fwd.1} parent=39 // pred_fallthru
        _
    $region40: #{_focal_loss_fwd.1} parent=5 // pred_fallthru
      _
  $region6: #{_focal_loss_fwd.1} parent=0 // loop_footer
    %s12 = sadd.s32 1, %s8
  $region7: #{_focal_loss_fwd.1} parent=0 // loop_footer_branch
    %7 = sbr.rel target = $region3
  $region8: #{_focal_loss_fwd.1} parent=0 // loop_exit
    _

</llo_original>
